<compile_context>
chip_gen: v5e
topology: v5e:2x2
jax: 0.10.0
libtpu: 0.0.40
codegen_flags: <defaults>
</compile_context>

<pallas_src>
import jax
import jax.numpy as jnp
from jax.experimental import pallas as pl
from jax.experimental.pallas import tpu as pltpu


def _importance_kernel(x_ref, w_ref, b_ref, o_ref):
    # x_ref : (TM, H) VMEM tile of flattened rows
    # w_ref : (H, 1)  VMEM weight column (same block every grid step)
    # b_ref : (1, 1)  SMEM scalar bias
    # o_ref : (TM, 1) VMEM output tile
    scores = jnp.dot(x_ref[...], w_ref[...],
                     preferred_element_type=jnp.float32)          # MXU, f32 accum
    o_ref[...] = (scores + b_ref[0, 0]).astype(o_ref.dtype)


def _pick_row_tile(num_rows: int, hidden: int, itemsize: int) -> int:
    """Largest row tile whose double-buffered input fits a conservative VMEM budget."""
    # ~8 MiB per input buffer => <=16 MiB double-buffered: safe within the default
    # scoped-VMEM limit on v5e/v6e and on v7x's smaller (64 MiB physical) VMEM.
    budget = 8 * 1024 * 1024
    tm = budget // max(hidden * itemsize, 1)
    tm = max(8, min(int(tm), 1024))
    if tm >= 128:
        tm = (tm // 128) * 128   # lane/sublane friendly; amortizes ~0.35us/step overhead
    else:
        tm = (tm // 8) * 8       # at least sublane (8) aligned
    if num_rows <= tm:
        tm = num_rows            # single full-extent tile (covers small / odd row counts)
    return tm


def importance_scoring(x: jax.Array, w: jax.Array, b: jax.Array,
                       *, row_tile: int | None = None) -> jax.Array:
    """scores[b, s] = x[b, s, :] @ w + bias  == nn.Linear(H, 1)(x).squeeze(-1).

    Args:
      x: (B, S, H) activations.
      w: (H,) linear weight (nn.Linear(hidden_dim, 1).weight.squeeze(0)).
      b: ()   linear bias scalar.
    Returns:
      (B, S) importance scores, dtype of x.
    """
    B, S, H = x.shape
    R = B * S
    xf = x.reshape(R, H)
    w_col = w.reshape(H, 1).astype(x.dtype)              # MXU operand in activation dtype
    b2 = jnp.asarray(b, jnp.float32).reshape(1, 1)       # scalar bias in SMEM, f32

    tm = row_tile if row_tile is not None else _pick_row_tile(R, H, x.dtype.itemsize)
    grid = (pl.cdiv(R, tm),)

    out = pl.pallas_call(
        _importance_kernel,
        out_shape=jax.ShapeDtypeStruct((R, 1), x.dtype),
        grid_spec=pltpu.PrefetchScalarGridSpec(
            num_scalar_prefetch=0,
            grid=grid,
            in_specs=[
                pl.BlockSpec((tm, H), lambda i: (i, 0)),   # row tile of x
                pl.BlockSpec((H, 1), lambda i: (0, 0)),    # full weight column
                pl.BlockSpec(memory_space=pltpu.SMEM),     # scalar bias
            ],
            out_specs=pl.BlockSpec((tm, 1), lambda i: (i, 0)),
        ),
        compiler_params=pltpu.CompilerParams(
            dimension_semantics=("parallel",)),
    )(xf, w_col, b2)
    return out.reshape(B, S)


if __name__ == "__main__":
    key = jax.random.PRNGKey(0)

    # Case 1: small f32 case matching the PyTorch module (batch, num_segments, hidden).
    batch, num_segments, hidden_dim = 2, 8, 32
    kx, kw, kb, key = jax.random.split(key, 4)
    x = jax.random.normal(kx, (batch, num_segments, hidden_dim), dtype=jnp.float32)
    bound = 1.0 / jnp.sqrt(hidden_dim)
    w = jax.random.uniform(kw, (hidden_dim,), minval=-bound, maxval=bound, dtype=jnp.float32)
    b = jax.random.uniform(kb, (), minval=-bound, maxval=bound, dtype=jnp.float32)

    scores = importance_scoring(x, w, b)
    jax.block_until_ready(scores)
    ref = jnp.einsum("bsh,h->bs", x, w) + b
    assert scores.shape == (batch, num_segments)
    # Tolerance accounts for MXU f32 matmul precision semantics (possible bf16 passes).
    assert jnp.allclose(scores, ref, atol=1e-2, rtol=1e-2)

    # Case 2: bf16 activations, multi-step row grid (exercises the tiled MXU path).
    B2, S2, H2 = 4, 64, 128
    kx2, kw2, kb2, key = jax.random.split(key, 4)
    x2 = jax.random.normal(kx2, (B2, S2, H2), dtype=jnp.float32).astype(jnp.bfloat16)
    bound2 = 1.0 / jnp.sqrt(H2)
    w2 = jax.random.uniform(kw2, (H2,), minval=-bound2, maxval=bound2, dtype=jnp.float32)
    bias2 = jax.random.uniform(kb2, (), minval=-bound2, maxval=bound2, dtype=jnp.float32)

    scores2 = importance_scoring(x2, w2, bias2, row_tile=128)   # grid = (2,)
    jax.block_until_ready(scores2)
    ref2 = jnp.einsum("bsh,h->bs", x2.astype(jnp.float32), w2) + bias2
    assert scores2.shape == (B2, S2)
    assert jnp.allclose(scores2.astype(jnp.float32), ref2, atol=5e-2, rtol=5e-2)

    print("KERNEL_OK")
</pallas_src>

<mosaic_0001>
module attributes {stable_mosaic.version = 11 : i64} {
  func.func @_importance_kernel(%arg0: i32, %arg1: memref<16x32xf32, #tpu.memory_space<vmem>>, %arg2: memref<32x1xf32, #tpu.memory_space<vmem>>, %arg3: memref<1x1xf32, #tpu.memory_space<smem>>, %arg4: memref<16x1xf32, #tpu.memory_space<vmem>>) attributes {dimension_semantics = [#tpu.dimension_semantics<parallel>], iteration_bounds = array<i64: 1>, scalar_prefetch = 0 : i64, scratch_operands = 0 : i64, tpu.core_type = #tpu.core_type<tc>, window_params = [{transform_indices = @transform_0, window_bounds = array<i64: 16, 32>}, {pipeline_mode = #tpu.pipeline_mode<synchronous>, transform_indices = @transform_1, window_bounds = array<i64: 32, 1>}, {transform_indices = @transform_2, window_bounds = array<i64: 1, 1>}, {transform_indices = @transform_3, window_bounds = array<i64: 16, 1>}]} {
    %c0 = arith.constant 0 : index
    %c0_0 = arith.constant 0 : index
    %0 = vector.load %arg1[%c0, %c0_0] : memref<16x32xf32, #tpu.memory_space<vmem>>, vector<16x32xf32>
    %c0_1 = arith.constant 0 : index
    %c0_2 = arith.constant 0 : index
    %1 = vector.load %arg2[%c0_1, %c0_2] : memref<32x1xf32, #tpu.memory_space<vmem>>, vector<32x1xf32>
    %cst = arith.constant dense<0.000000e+00> : vector<16x1xf32>
    %2 = tpu.matmul %0, %1, %cst {dimension_numbers = #tpu.dot_dimension_numbers<[1], [0], [0], [1], [0, 0, 1, 1], [], []>} : vector<16x32xf32>, vector<32x1xf32>, vector<16x1xf32> -> vector<16x1xf32>
    %c0_3 = arith.constant 0 : index
    %c0_4 = arith.constant 0 : index
    %3 = memref.load %arg3[%c0_3, %c0_4] : memref<1x1xf32, #tpu.memory_space<smem>>
    %4 = vector.broadcast %3 : f32 to vector<16x1xf32>
    %5 = arith.addf %2, %4 : vector<16x1xf32>
    %c0_5 = arith.constant 0 : index
    %c0_6 = arith.constant 0 : index
    %6 = vector.load %arg4[%c0_5, %c0_6] : memref<16x1xf32, #tpu.memory_space<vmem>>, vector<16x1xf32>
    tpu.vector_store %arg4[%c0_5, %c0_6], %5 {strides = array<i32>} : memref<16x1xf32, #tpu.memory_space<vmem>>, vector<16x1xf32>,
    return
  }
  func.func @transform_0(%arg0: i32) -> (i32, i32) {
    %c0_i32 = arith.constant 0 : i32
    %c0_i32_0 = arith.constant 0 : i32
    return %arg0, %c0_i32 : i32, i32
  }
  func.func @transform_1(%arg0: i32) -> (i32, i32) {
    %c0_i32 = arith.constant 0 : i32
    %c0_i32_0 = arith.constant 0 : i32
    %c0_i32_1 = arith.constant 0 : i32
    return %c0_i32, %c0_i32_0 : i32, i32
  }
  func.func @transform_2(%arg0: i32) -> (i32, i32) {
    %c0_i32 = arith.constant 0 : i32
    %c0_i32_0 = arith.constant 0 : i32
    %c0_i32_1 = arith.constant 0 : i32
    return %c0_i32, %c0_i32_0 : i32, i32
  }
  func.func @transform_3(%arg0: i32) -> (i32, i32) {
    %c0_i32 = arith.constant 0 : i32
    %c0_i32_0 = arith.constant 0 : i32
    return %arg0, %c0_i32 : i32, i32
  }
}

</mosaic_0001>

<llo_original>
// kernel: tpu_custom_call.1
$region0: #{tpu_custom_call.1}
  #allocation0 [shape = 'u32[]', space=smem, size = 0x4, offset = 0x4, fixed_abs, tag = 'smem constant byte address 0x4 - core index']
  #allocation1 [shape = 'u32[72,128]{1,0:T(1,128)}', space=vmem, size = 0x9000, scoped, tag = 'internal scratch']
  #allocation2 [shape = 'f32[1,1]{1,0:T(1,128)S(6)}', space=smem, size = 0x200, scoped, tag = 'scoped memory for tpu_custom_call.1']
  %s0 = inlined_call_operand.vmem [shape: f32[16,32], index: 0, kind: input, shape index: {}]
  %s1 = inlined_call_operand.vmem [shape: f32[32,1], index: 1, kind: input, shape index: {}]
  %s2 = inlined_call_operand.<no memory space> [shape: f32[1,1], index: 2, kind: input, shape index: {}]
  %s3 = inlined_call_operand.vmem [shape: f32[16,1], index: 3, kind: output, shape index: {}]
  %s4 = sld [smem:[#allocation0]]
  $region22: #{tpu_custom_call.1} parent=0
    _
  %s6 = ssub.s32 1, %s4
  %s7 = scalar_select 0, %s6, %s4
  %8 = sst [smem:[#allocation2]] %s2
  // Predicated region
  $region2: #{tpu_custom_call.1} parent=0 // pred_check
    _
  $region3: #{tpu_custom_call.1} parent=0 // pred_check_branch
    %10 = sbr.rel (0) target = $region5
  $region4: #{tpu_custom_call.1} parent=0 // pred_region
    _
  $region5: #{tpu_custom_call.1} parent=0 // pred_fallthru
    _
  // Predicated region
  $region6: #{tpu_custom_call.1} parent=0 // pred_check
    _
  $region7: #{tpu_custom_call.1} parent=0 // pred_check_branch
    %12 = sbr.rel (0) target = $region9
  $region8: #{tpu_custom_call.1} parent=0 // pred_region
    _
  $region9: #{tpu_custom_call.1} parent=0 // pred_fallthru
    _
  // Predicated region
  $region10: #{tpu_custom_call.1} parent=0 // pred_check
    _
  $region11: #{tpu_custom_call.1} parent=0 // pred_check_branch
    %14 = sbr.rel (0) target = $region13
  $region12: #{tpu_custom_call.1} parent=0 // pred_region
    _
  $region13: #{tpu_custom_call.1} parent=0 // pred_fallthru
    _
  %v15 = vld [vmem:[%s0] sm:$0xff]
  %v16 = vld [vmem:[%s0 + $0x8] sm:$0xff]
  %v17 = vld [vmem:[%s1] sm:$0xff]
  %v18 = vld [vmem:[%s1 + $0x8] sm:$0xff]
  %v19 = vld [vmem:[%s1 + $0x10] sm:$0xff]
  %v20 = vld [vmem:[%s1 + $0x18] sm:$0xff]
  %s21 = sld [smem:[#allocation2]]
  %v22 = vstv %s21
  %vm23 = vcmask 261120
  %v25 = vsel %vm23, %v15, 0
  %v28 = vsel %vm23, %v16, 0
  %30 = vmatpush.msra.mxu0 0.0
  %31 = vmatpush.msra.mxu0 0.0
  %32 = vmatpush.msra.mxu0 0.0
  %33 = vmatpush.msra.mxu0 0.0
  %34 = vmatpush.msra.mxu0 0.0
  %35 = vmatpush.msra.mxu0 0.0
  %36 = vmatpush.msra.mxu0 0.0
  %37 = vmatpush.msra.mxu0 0.0
  %38 = vmatpush.msra.mxu0 0.0
  %39 = vmatpush.msra.mxu0 0.0
  %40 = vmatpush.msra.mxu0 0.0
  %41 = vmatpush.msra.mxu0 0.0
  %42 = vmatpush.msra.mxu0 %v20
  %43 = vmatpush.msra.mxu0 %v19
  %44 = vmatpush.msra.mxu0 %v18
  %45 = vmatpush.msra.mxu0 %v17
  %46 = vmatmul.f32.gmra.mxu0 %v25
  %v47 = vpop.f32.mrf.mxu0
  %v48 = vadd.f32 %v22, %v47
  %49 = vmatmul.f32.gmra.mxu0 %v28
  %v50 = vpop.f32.mrf.mxu0
  %v51 = vadd.f32 %v22, %v50
  %52 = vdwg.mxu0
  %vm53 = vcmask 7168
  %54 = vst.msk [vmem:[%s3] sm:$0xff] %vm53, %v48
  %55 = vst.msk [vmem:[%s3 + $0x8] sm:$0xff] %vm53, %v51
  // Predicated region
  $region14: #{tpu_custom_call.1} parent=0 // pred_check
    _
  $region15: #{tpu_custom_call.1} parent=0 // pred_check_branch
    %57 = sbr.rel (0) target = $region17
  $region16: #{tpu_custom_call.1} parent=0 // pred_region
    _
  $region17: #{tpu_custom_call.1} parent=0 // pred_fallthru
    _
  // Predicated region
  $region18: #{tpu_custom_call.1} parent=0 // pred_check
    _
  $region19: #{tpu_custom_call.1} parent=0 // pred_check_branch
    %59 = sbr.rel (0) target = $region21
  $region20: #{tpu_custom_call.1} parent=0 // pred_region
    _
  $region21: #{tpu_custom_call.1} parent=0 // pred_fallthru
    _

</llo_original>
